<compile_context>
chip_gen: v6e
topology: v6e:2x2x1
jax: 0.10.0
libtpu: 0.0.40
codegen_flags: <defaults>
</compile_context>

<pallas_src>
import functools

import jax
import jax.numpy as jnp
import numpy as np
from jax.experimental import pallas as pl
from jax.experimental.pallas import tpu as pltpu


def _on_tpu() -> bool:
    try:
        return jax.devices()[0].platform == "tpu"
    except Exception:
        return False


def _default_compute_dtype():
    # bf16 MXU operands (f32 accumulation via preferred_element_type) on every
    # TPU generation — v5e's MXU is a bf16 unit; only its VPU/EUP lack bf16 and
    # the elementwise tail stays f32 regardless.  f32 fallback off-TPU.
    return jnp.bfloat16 if _on_tpu() else jnp.float32


def _pick_row_tiling(rows: int, target_rows: int) -> tuple[int, int]:
    """Return (G, R): grid steps and lane-dense rows per step.

    Small batches -> one grid step.  Large batches -> tiles of ~target_rows
    rows (>= ~85% of HBM roofline per the tiling measurements) so the auto
    pipeline double-buffers x/out while the weight blocks stay resident.
    """
    if rows <= target_rows:
        return 1, rows
    # Largest divisor of `rows` that is <= target_rows.
    best = 1
    r = 1
    while r * r <= rows:
        if rows % r == 0:
            if r <= target_rows:
                best = max(best, r)
            q = rows // r
            if q <= target_rows:
                best = max(best, q)
        r += 1
    if best < 256:
        # No friendly divisor (e.g. prime row count): fall back to one block
        # rather than degenerate 1-row steps.  Still only rows*128*4 B of f32.
        return 1, rows
    return rows // best, best


def resblock_kernel(x_ref, w1_ref, b1_ref, w2_ref, b2_ref, o_ref):
    # x_ref: (1, R, 128) lane-packed f32.  w1/w2 are P-way block-diagonal in the
    # compute dtype (bf16 on TPU).  Biases are tiled P times and stay f32.
    x = x_ref[0]                                                    # (R, 128) f32
    cd = w1_ref.dtype
    h = jnp.dot(x.astype(cd), w1_ref[...],
                preferred_element_type=jnp.float32) + b1_ref[...]   # (R, P*H) f32
    h = jnp.tanh(h)
    y = jnp.dot(h.astype(cd), w2_ref[...],
                preferred_element_type=jnp.float32) + b2_ref[...]   # (R, 128) f32
    o_ref[0] = jnp.tanh(y + x).astype(o_ref.dtype)                  # lane-dense store


def prepare_resblock_params(w1, b1, w2, b2, *, compute_dtype=None):
    """One-off weight expansion — call once per weight update, NOT per forward.

    w1: [D, H], b1: [H], w2: [H, D], b2: [D]  ->  block-diagonal / tiled blocks.
    """
    D, H = w1.shape
    assert w2.shape == (H, D) and b1.shape == (H,) and b2.shape == (D,)
    assert 128 % D == 0, "input_dim must divide 128 for the lane-packed layout"
    P = 128 // D
    if compute_dtype is None:
        compute_dtype = _default_compute_dtype()
    eye_p = jnp.eye(P, dtype=jnp.float32)
    w1_big = jnp.kron(eye_p, w1.astype(jnp.float32)).astype(compute_dtype)  # (128, P*H)
    w2_big = jnp.kron(eye_p, w2.astype(jnp.float32)).astype(compute_dtype)  # (P*H, 128)
    b1_big = jnp.tile(b1.reshape(1, H).astype(jnp.float32), (1, P))         # (1, P*H)
    b2_big = jnp.tile(b2.reshape(1, D).astype(jnp.float32), (1, P))         # (1, 128)
    return w1_big, b1_big, w2_big, b2_big


@functools.partial(jax.jit, static_argnames=("out_dtype", "target_rows"))
def resblock_apply(x, w1_big, b1_big, w2_big, b2_big, *,
                   out_dtype=jnp.float32, target_rows=1024):
    """Hot path: bytes-identical reshape of x + a single pallas_call."""
    B, D = x.shape
    PD, PH = w1_big.shape
    assert PD == 128
    P = PD // D
    assert B % P == 0, "batch must be divisible by 128 // input_dim"
    rows = B // P                       # total lane-dense rows = B*D/128
    G, R = _pick_row_tiling(rows, target_rows)

    x_dense = x.astype(jnp.float32).reshape(G, R, PD)

    w_itemsize = jnp.dtype(w1_big.dtype).itemsize
    cost = pl.CostEstimate(
        flops=4 * G * R * PD * PH,                       # 2 matmuls at the MXU shape
        transcendentals=G * R * (PH + PD),               # two tanh passes
        bytes_accessed=(x_dense.size * 4
                        + G * R * PD * jnp.dtype(out_dtype).itemsize
                        + (w1_big.size + w2_big.size) * w_itemsize
                        + (b1_big.size + b2_big.size) * 4),
    )

    out = pl.pallas_call(
        resblock_kernel,
        out_shape=jax.ShapeDtypeStruct((G, R, PD), out_dtype),
        grid_spec=pltpu.PrefetchScalarGridSpec(
            num_scalar_prefetch=0,
            grid=(G,),
            in_specs=[
                pl.BlockSpec((1, R, PD), lambda i: (i, 0, 0)),  # x tile (pipelined)
                pl.BlockSpec((PD, PH), lambda i: (0, 0)),       # W1 block-diag (resident)
                pl.BlockSpec((1, PH), lambda i: (0, 0)),        # b1 (tiled, resident)
                pl.BlockSpec((PH, PD), lambda i: (0, 0)),       # W2 block-diag (resident)
                pl.BlockSpec((1, PD), lambda i: (0, 0)),        # b2 (tiled, resident)
            ],
            out_specs=pl.BlockSpec((1, R, PD), lambda i: (i, 0, 0)),
        ),
        compiler_params=pltpu.CompilerParams(
            # Independent row tiles: 1 step for small batches; many "parallel"
            # steps (sharded across v7x's 2 TensorCores) for large batches.
            dimension_semantics=("parallel",),
        ),
        cost_estimate=cost,
    )(x_dense, w1_big, b1_big, w2_big, b2_big)

    # Bytes-identical row-major reshape back to [B, D].
    return out.reshape(B, D)


def resblock_pallas(x, w1, b1, w2, b2, *, compute_dtype=None, out_dtype=jnp.float32):
    """Convenience: expand weights + run. Prefer caching prepare_resblock_params()."""
    params = prepare_resblock_params(w1, b1, w2, b2, compute_dtype=compute_dtype)
    return resblock_apply(x, *params, out_dtype=out_dtype)


def resblock_ref(x, w1, b1, w2, b2):
    h = jnp.tanh(x @ w1 + b1.reshape(1, -1))
    y = h @ w2 + b2.reshape(1, -1)
    return jnp.tanh(y + x)


if __name__ == "__main__":
    # Small shapes consistent with the module's forward.
    B, input_dim, hidden_dim = 64, 16, 32

    key = jax.random.PRNGKey(0)
    kx, kw1, kb1, kw2, kb2 = jax.random.split(key, 5)

    x = jax.random.normal(kx, (B, input_dim), dtype=jnp.float32)

    # Deterministic PyTorch-Linear-style init: U(-1/sqrt(fan_in), 1/sqrt(fan_in)).
    lim1 = 1.0 / np.sqrt(input_dim)
    lim2 = 1.0 / np.sqrt(hidden_dim)
    w1 = jax.random.uniform(kw1, (input_dim, hidden_dim), jnp.float32, -lim1, lim1)
    b1 = jax.random.uniform(kb1, (hidden_dim,), jnp.float32, -lim1, lim1)
    w2 = jax.random.uniform(kw2, (hidden_dim, input_dim), jnp.float32, -lim2, lim2)
    b2 = jax.random.uniform(kb2, (input_dim,), jnp.float32, -lim2, lim2)

    cdt = _default_compute_dtype()

    # One-off weight expansion (cached across forwards in real use).
    params = jax.block_until_ready(
        prepare_resblock_params(w1, b1, w2, b2, compute_dtype=cdt))

    # Hot path: single jitted reshape + pallas_call.
    out = resblock_apply(x, *params)
    out = jax.block_until_ready(out)

    ref = resblock_ref(x, w1, b1, w2, b2)
    # bf16 dot operands need a looser tolerance; f32 compute path stays tight.
    tol = 2.5e-2 if cdt == jnp.bfloat16 else 1e-5
    np.testing.assert_allclose(np.asarray(out), np.asarray(ref), rtol=tol, atol=tol)

    # TODO(synk): use_batch_norm / dropout branches are disabled by the default
    # module config (use_batch_norm=False, dropout_rate=0.0) and are not implemented.
    print("KERNEL_OK")
</pallas_src>

<mosaic_0001>
module attributes {stable_mosaic.version = 11 : i64} {
  func.func @resblock_kernel(%arg0: i32, %arg1: memref<1x8x128xf32, #tpu.memory_space<vmem>>, %arg2: memref<128x256xf32, #tpu.memory_space<vmem>>, %arg3: memref<1x256xf32, #tpu.memory_space<vmem>>, %arg4: memref<256x128xf32, #tpu.memory_space<vmem>>, %arg5: memref<1x128xf32, #tpu.memory_space<vmem>>, %arg6: memref<1x8x128xf32, #tpu.memory_space<vmem>>) attributes {dimension_semantics = [#tpu.dimension_semantics<parallel>], iteration_bounds = array<i64: 1>, scalar_prefetch = 0 : i64, scratch_operands = 0 : i64, tpu.core_type = #tpu.core_type<tc>, window_params = [{transform_indices = @transform_0, window_bounds = array<i64: 1, 8, 128>}, {pipeline_mode = #tpu.pipeline_mode<synchronous>, transform_indices = @transform_1, window_bounds = array<i64: 128, 256>}, {pipeline_mode = #tpu.pipeline_mode<synchronous>, transform_indices = @transform_2, window_bounds = array<i64: 1, 256>}, {pipeline_mode = #tpu.pipeline_mode<synchronous>, transform_indices = @transform_3, window_bounds = array<i64: 256, 128>}, {pipeline_mode = #tpu.pipeline_mode<synchronous>, transform_indices = @transform_4, window_bounds = array<i64: 1, 128>}, {transform_indices = @transform_5, window_bounds = array<i64: 1, 8, 128>}]} {
    %c0 = arith.constant 0 : index
    %c0_0 = arith.constant 0 : index
    %c0_1 = arith.constant 0 : index
    %0 = vector.load %arg1[%c0, %c0_0, %c0_1] : memref<1x8x128xf32, #tpu.memory_space<vmem>>, vector<1x8x128xf32>
    %1 = vector.shape_cast %0 : vector<1x8x128xf32> to vector<8x128xf32>
    %c0_2 = arith.constant 0 : index
    %c0_3 = arith.constant 0 : index
    %2 = vector.load %arg2[%c0_2, %c0_3] : memref<128x256xf32, #tpu.memory_space<vmem>>, vector<128x256xf32>
    %cst = arith.constant dense<0.000000e+00> : vector<8x256xf32>
    %3 = tpu.matmul %1, %2, %cst {dimension_numbers = #tpu.dot_dimension_numbers<[1], [0], [0], [1], [0, 0, 1, 1], [], []>} : vector<8x128xf32>, vector<128x256xf32>, vector<8x256xf32> -> vector<8x256xf32>
    %c0_4 = arith.constant 0 : index
    %c0_5 = arith.constant 0 : index
    %4 = vector.load %arg3[%c0_4, %c0_5] : memref<1x256xf32, #tpu.memory_space<vmem>>, vector<1x256xf32>
    %5 = vector.broadcast %4 : vector<1x256xf32> to vector<8x256xf32>
    %6 = arith.addf %3, %5 : vector<8x256xf32>
    %7 = math.tanh %6 : vector<8x256xf32>
    %c0_6 = arith.constant 0 : index
    %c0_7 = arith.constant 0 : index
    %8 = vector.load %arg4[%c0_6, %c0_7] : memref<256x128xf32, #tpu.memory_space<vmem>>, vector<256x128xf32>
    %cst_8 = arith.constant dense<0.000000e+00> : vector<8x128xf32>
    %9 = tpu.matmul %7, %8, %cst_8 {dimension_numbers = #tpu.dot_dimension_numbers<[1], [0], [0], [1], [0, 0, 1, 1], [], []>} : vector<8x256xf32>, vector<256x128xf32>, vector<8x128xf32> -> vector<8x128xf32>
    %c0_9 = arith.constant 0 : index
    %c0_10 = arith.constant 0 : index
    %10 = vector.load %arg5[%c0_9, %c0_10] : memref<1x128xf32, #tpu.memory_space<vmem>>, vector<1x128xf32>
    %11 = vector.broadcast %10 : vector<1x128xf32> to vector<8x128xf32>
    %12 = arith.addf %9, %11 : vector<8x128xf32>
    %13 = arith.addf %12, %1 : vector<8x128xf32>
    %14 = math.tanh %13 : vector<8x128xf32>
    %c0_11 = arith.constant 0 : index
    %c0_12 = arith.constant 0 : index
    %c0_13 = arith.constant 0 : index
    %15 = vector.load %arg6[%c0_11, %c0_12, %c0_13] : memref<1x8x128xf32, #tpu.memory_space<vmem>>, vector<1x8x128xf32>
    %16 = vector.shape_cast %15 : vector<1x8x128xf32> to vector<8x128xf32>
    %17 = vector.shape_cast %14 : vector<8x128xf32> to vector<1x8x128xf32>
    tpu.vector_store %arg6[%c0_11, %c0_12, %c0_13], %17 {strides = array<i32>} : memref<1x8x128xf32, #tpu.memory_space<vmem>>, vector<1x8x128xf32>,
    return
  }
  func.func @transform_0(%arg0: i32) -> (i32, i32, i32) {
    %c0_i32 = arith.constant 0 : i32
    %c0_i32_0 = arith.constant 0 : i32
    %c0_i32_1 = arith.constant 0 : i32
    return %arg0, %c0_i32, %c0_i32_0 : i32, i32, i32
  }
  func.func @transform_1(%arg0: i32) -> (i32, i32) {
    %c0_i32 = arith.constant 0 : i32
    %c0_i32_0 = arith.constant 0 : i32
    %c0_i32_1 = arith.constant 0 : i32
    return %c0_i32, %c0_i32_0 : i32, i32
  }
  func.func @transform_2(%arg0: i32) -> (i32, i32) {
    %c0_i32 = arith.constant 0 : i32
    %c0_i32_0 = arith.constant 0 : i32
    %c0_i32_1 = arith.constant 0 : i32
    return %c0_i32, %c0_i32_0 : i32, i32
  }
  func.func @transform_3(%arg0: i32) -> (i32, i32) {
    %c0_i32 = arith.constant 0 : i32
    %c0_i32_0 = arith.constant 0 : i32
    %c0_i32_1 = arith.constant 0 : i32
    return %c0_i32, %c0_i32_0 : i32, i32
  }
  func.func @transform_4(%arg0: i32) -> (i32, i32) {
    %c0_i32 = arith.constant 0 : i32
    %c0_i32_0 = arith.constant 0 : i32
    %c0_i32_1 = arith.constant 0 : i32
    return %c0_i32, %c0_i32_0 : i32, i32
  }
  func.func @transform_5(%arg0: i32) -> (i32, i32, i32) {
    %c0_i32 = arith.constant 0 : i32
    %c0_i32_0 = arith.constant 0 : i32
    %c0_i32_1 = arith.constant 0 : i32
    return %arg0, %c0_i32, %c0_i32_0 : i32, i32, i32
  }
}

</mosaic_0001>

<llo_original>
// kernel: resblock_apply.1
$region0: #{resblock_apply.1}
  #allocation0 [shape = 'u32[]', space=smem, size = 0x4, offset = 0x4, fixed_abs, tag = 'smem constant byte address 0x4 - core index']
  #allocation1 [shape = 'u32[144,128]{1,0:T(1,128)}', space=vmem, size = 0x12000, scoped, tag = 'internal scratch']
  %s0 = inlined_call_operand.vmem [shape: f32[1,8,128], index: 0, kind: input, shape index: {}]
  %s1 = inlined_call_operand.hbm [shape: f32[128,256], index: 1, kind: input, shape index: {}]
  %s2 = inlined_call_operand.vmem [shape: f32[1,256], index: 2, kind: input, shape index: {}]
  %s3 = inlined_call_operand.hbm [shape: f32[256,128], index: 3, kind: input, shape index: {}]
  %s4 = inlined_call_operand.vmem [shape: f32[1,128], index: 4, kind: input, shape index: {}]
  %s5 = inlined_call_operand.vmem [shape: f32[1,8,128], index: 5, kind: output, shape index: {}]
  %s6 = sld [smem:[#allocation0]]
  $region38: #{resblock_apply.1} parent=0
    _
  %s8 = ssub.s32 1, %s6
  %s9 = scalar_select 0, %s8, %s6
  $region1: #{resblock_apply.1} parent=0
    #allocation2 [shape = 'u8[131072]{0}', space=vmem, size = 0x20000, scoped, tag = 'input window, operand 1, single buffered']
    #allocation3 [shape = 's32[1]{0}', space=sflag, size = 0x4, scoped, tag = 'scoped memory for resblock_apply.1']
    #allocation4 [shape = 'u8[131072]{0}', space=vmem, size = 0x20000, scoped, tag = 'input window, operand 3, single buffered']
    #allocation5 [shape = 's32[1]{0}', space=sflag, size = 0x4, scoped, tag = 'scoped memory for resblock_apply.1']
    %10 = vsyncpa [#allocation3], 0
    %11 = vsyncpa [#allocation5], 0
    // Predicated region
    $region2: #{resblock_apply.1} parent=1 // pred_check
      _
    $region3: #{resblock_apply.1} parent=1 // pred_check_branch
      %13 = sbr.rel (0) target = $region5
    $region4: #{resblock_apply.1} parent=1 // pred_region
      _
    $region5: #{resblock_apply.1} parent=1 // pred_fallthru
      _
    // Predicated region
    $region6: #{resblock_apply.1} parent=1 // pred_check
      _
    $region7: #{resblock_apply.1} parent=1 // pred_check_branch
      %15 = sbr.rel (0) target = $region9
    $region8: #{resblock_apply.1} parent=1 // pred_region
      %s17 = ssub.s32 4096, 4096
      %18 = vsyncadd [#allocation3], %s17
      %s19 = sshll.u32 [#allocation2], 4
      %s20 = int_to_ptr.vmem [resolvable:$true] %s19
      %25 = dma.hbm_to_vmem [thread:$0]  %s1, 4096, %s20, [#allocation3], 256, 256, 16
    $region9: #{resblock_apply.1} parent=1 // pred_fallthru
      _
    // Predicated region
    $region10: #{resblock_apply.1} parent=1 // pred_check
      _
    $region11: #{resblock_apply.1} parent=1 // pred_check_branch
      %27 = sbr.rel (0) target = $region13
    $region12: #{resblock_apply.1} parent=1 // pred_region
      _
    $region13: #{resblock_apply.1} parent=1 // pred_fallthru
      _
    // Predicated region
    $region14: #{resblock_apply.1} parent=1 // pred_check
      _
    $region15: #{resblock_apply.1} parent=1 // pred_check_branch
      %29 = sbr.rel (0) target = $region17
    $region16: #{resblock_apply.1} parent=1 // pred_region
      %s31 = ssub.s32 4096, 4096
      %32 = vsyncadd [#allocation5], %s31
      %s33 = sshll.u32 [#allocation4], 4
      %s34 = int_to_ptr.vmem [resolvable:$true] %s33
      %39 = dma.hbm_to_vmem [thread:$0]  %s3, 4096, %s34, [#allocation5], 128, 128, 8
    $region17: #{resblock_apply.1} parent=1 // pred_fallthru
      _
    // Predicated region
    $region18: #{resblock_apply.1} parent=1 // pred_check
      _
    $region19: #{resblock_apply.1} parent=1 // pred_check_branch
      %41 = sbr.rel (0) target = $region21
    $region20: #{resblock_apply.1} parent=1 // pred_region
      _
    $region21: #{resblock_apply.1} parent=1 // pred_fallthru
      _
    // Predicated region
    $region22: #{resblock_apply.1} parent=1 // pred_check
      _
    $region23: #{resblock_apply.1} parent=1 // pred_check_branch
      %43 = sbr.rel (0) target = $region25
    $region24: #{resblock_apply.1} parent=1 // pred_region
      %44 = dma.done [#allocation3], 4096
    $region25: #{resblock_apply.1} parent=1 // pred_fallthru
      _
    // Predicated region
    $region26: #{resblock_apply.1} parent=1 // pred_check
      _
    $region27: #{resblock_apply.1} parent=1 // pred_check_branch
      %46 = sbr.rel (0) target = $region29
    $region28: #{resblock_apply.1} parent=1 // pred_region
      %47 = dma.done [#allocation5], 4096
    $region29: #{resblock_apply.1} parent=1 // pred_fallthru
      _
    %v48 = vld [vmem:[%s0] sm:$0xff]
    %v49 = vld [vmem:[#allocation2] sm:$0xff]
    %v50 = vld [vmem:[#allocation2 + $0x8] sm:$0xff]
    %v51 = vld [vmem:[#allocation2 + $0x10] sm:$0xff]
    %v52 = vld [vmem:[#allocation2 + $0x18] sm:$0xff]
    %v53 = vld [vmem:[#allocation2 + $0x20] sm:$0xff]
    %v54 = vld [vmem:[#allocation2 + $0x28] sm:$0xff]
    %v55 = vld [vmem:[#allocation2 + $0x30] sm:$0xff]
    %v56 = vld [vmem:[#allocation2 + $0x38] sm:$0xff]
    %v57 = vld [vmem:[#allocation2 + $0x40] sm:$0xff]
    %v58 = vld [vmem:[#allocation2 + $0x48] sm:$0xff]
    %v59 = vld [vmem:[#allocation2 + $0x50] sm:$0xff]
    %v60 = vld [vmem:[#allocation2 + $0x58] sm:$0xff]
    %v61 = vld [vmem:[#allocation2 + $0x60] sm:$0xff]
    %v62 = vld [vmem:[#allocation2 + $0x68] sm:$0xff]
    %v63 = vld [vmem:[#allocation2 + $0x70] sm:$0xff]
    %v64 = vld [vmem:[#allocation2 + $0x78] sm:$0xff]
    %v65 = vld [vmem:[#allocation2 + $0x80] sm:$0xff]
    %v66 = vld [vmem:[#allocation2 + $0x88] sm:$0xff]
    %v67 = vld [vmem:[#allocation2 + $0x90] sm:$0xff]
    %v68 = vld [vmem:[#allocation2 + $0x98] sm:$0xff]
    %v69 = vld [vmem:[#allocation2 + $0xa0] sm:$0xff]
    %v70 = vld [vmem:[#allocation2 + $0xa8] sm:$0xff]
    %v71 = vld [vmem:[#allocation2 + $0xb0] sm:$0xff]
    %v72 = vld [vmem:[#allocation2 + $0xb8] sm:$0xff]
    %v73 = vld [vmem:[#allocation2 + $0xc0] sm:$0xff]
    %v74 = vld [vmem:[#allocation2 + $0xc8] sm:$0xff]
    %v75 = vld [vmem:[#allocation2 + $0xd0] sm:$0xff]
    %v76 = vld [vmem:[#allocation2 + $0xd8] sm:$0xff]
    %v77 = vld [vmem:[#allocation2 + $0xe0] sm:$0xff]
    %v78 = vld [vmem:[#allocation2 + $0xe8] sm:$0xff]
    %v79 = vld [vmem:[#allocation2 + $0xf0] sm:$0xff]
    %v80 = vld [vmem:[#allocation2 + $0xf8] sm:$0xff]
    %v81 = vld [vmem:[%s2] sm:$0x3]
    %v83 = vlaneseq
    %v84 = vshrl.u32 %v83, 7
    %v85 = vsub.s32 0, %v84
    %v86 = vrot.slane %v81, %v85
    %v87 = vlaneseq
    %v88 = vshrl.u32 %v87, 7
    %v89 = vsub.s32 1, %v88
    %v90 = vrot.slane %v81, %v89
    %93 = vmatprep.subr.mxu0 %v80
    %94 = vmatpush1.msra.mxu0 %v79
    %95 = vmatprep.subr.mxu0 %v78
    %96 = vmatpush1.msra.mxu0 %v77
    %97 = vmatprep.subr.mxu0 %v76
    %98 = vmatpush1.msra.mxu0 %v75
    %99 = vmatprep.subr.mxu0 %v74
    %100 = vmatpush1.msra.mxu0 %v73
    %101 = vmatprep.subr.mxu0 %v72
    %102 = vmatpush1.msra.mxu0 %v71
    %103 = vmatprep.subr.mxu0 %v70
    %104 = vmatpush1.msra.mxu0 %v69
    %105 = vmatprep.subr.mxu0 %v68
    %106 = vmatpush1.msra.mxu0 %v67
    %107 = vmatprep.subr.mxu0 %v66
    %108 = vmatpush1.msra.mxu0 %v65
    %109 = vmatprep.subr.mxu0 %v64
    %110 = vmatpush1.msra.mxu0 %v63
    %111 = vmatprep.subr.mxu0 %v62
    %112 = vmatpush1.msra.mxu0 %v61
    %113 = vmatprep.subr.mxu0 %v60
    %114 = vmatpush1.msra.mxu0 %v59
    %115 = vmatprep.subr.mxu0 %v58
    %116 = vmatpush1.msra.mxu0 %v57
    %117 = vmatprep.subr.mxu0 %v56
    %118 = vmatpush1.msra.mxu0 %v55
    %119 = vmatprep.subr.mxu0 %v54
    %120 = vmatpush1.msra.mxu0 %v53
    %121 = vmatprep.subr.mxu0 %v52
    %122 = vmatpush1.msra.mxu0 %v51
    %123 = vmatprep.subr.mxu0 %v50
    %124 = vmatpush1.msra.mxu0 %v49
    %125 = vmatprep.subr.mxu0 0.0
    %126 = vmatpush2.msra.mxu0 0.0
    %127 = vmatprep.subr.mxu0 0.0
    %128 = vmatpush2.msra.mxu0 0.0
    %129 = vmatprep.subr.mxu0 0.0
    %130 = vmatpush2.msra.mxu0 0.0
    %131 = vmatprep.subr.mxu0 0.0
    %132 = vmatpush2.msra.mxu0 0.0
    %133 = vmatprep.subr.mxu0 0.0
    %134 = vmatpush2.msra.mxu0 0.0
    %135 = vmatprep.subr.mxu0 0.0
    %136 = vmatpush2.msra.mxu0 0.0
    %137 = vmatprep.subr.mxu0 0.0
    %138 = vmatpush2.msra.mxu0 0.0
    %139 = vmatprep.subr.mxu0 0.0
    %140 = vmatpush2.msra.mxu0 0.0
    %141 = vmatprep.subr.mxu0 0.0
    %142 = vmatpush2.msra.mxu0 0.0
    %143 = vmatprep.subr.mxu0 0.0
    %144 = vmatpush2.msra.mxu0 0.0
    %145 = vmatprep.subr.mxu0 0.0
    %146 = vmatpush2.msra.mxu0 0.0
    %147 = vmatprep.subr.mxu0 0.0
    %148 = vmatpush2.msra.mxu0 0.0
    %149 = vmatprep.subr.mxu0 0.0
    %150 = vmatpush2.msra.mxu0 0.0
    %151 = vmatprep.subr.mxu0 0.0
    %152 = vmatpush2.msra.mxu0 0.0
    %153 = vmatprep.subr.mxu0 0.0
    %154 = vmatpush2.msra.mxu0 0.0
    %155 = vmatprep.subr.mxu0 0.0
    %156 = vmatpush2.msra.mxu0 0.0
    %157 = vmatprep.mubr.f32.mxu0 0.0
    %158 = vmatmul.mubr.f32.gmra.mxu0 %v48
    %v159 = vpop.f32.mrf.mxu0
    %v160 = vadd.f32 %v86, %v159
    %v161 = vpop.f32.mrf.mxu0
    %v162 = vadd.f32 %v90, %v161
    %163 = vdwg.mxu0
    %v164 = vtanh.pop %v160
    %v165 = vtanh.pop %v162
    %v166 = vld [vmem:[#allocation4] sm:$0xff]
    %v167 = vld [vmem:[#allocation4 + $0x8] sm:$0xff]
    %v168 = vld [vmem:[#allocation4 + $0x10] sm:$0xff]
    %v169 = vld [vmem:[#allocation4 + $0x18] sm:$0xff]
    %v170 = vld [vmem:[#allocation4 + $0x20] sm:$0xff]
    %v171 = vld [vmem:[#allocation4 + $0x28] sm:$0xff]
    %v172 = vld [vmem:[#allocation4 + $0x30] sm:$0xff]
    %v173 = vld [vmem:[#allocation4 + $0x38] sm:$0xff]
    %v174 = vld [vmem:[#allocation4 + $0x40] sm:$0xff]
    %v175 = vld [vmem:[#allocation4 + $0x48] sm:$0xff]
    %v176 = vld [vmem:[#allocation4 + $0x50] sm:$0xff]
    %v177 = vld [vmem:[#allocation4 + $0x58] sm:$0xff]
    %v178 = vld [vmem:[#allocation4 + $0x60] sm:$0xff]
    %v179 = vld [vmem:[#allocation4 + $0x68] sm:$0xff]
    %v180 = vld [vmem:[#allocation4 + $0x70] sm:$0xff]
    %v181 = vld [vmem:[#allocation4 + $0x78] sm:$0xff]
    %v182 = vld [vmem:[#allocation4 + $0x80] sm:$0xff]
    %v183 = vld [vmem:[#allocation4 + $0x88] sm:$0xff]
    %v184 = vld [vmem:[#allocation4 + $0x90] sm:$0xff]
    %v185 = vld [vmem:[#allocation4 + $0x98] sm:$0xff]
    %v186 = vld [vmem:[#allocation4 + $0xa0] sm:$0xff]
    %v187 = vld [vmem:[#allocation4 + $0xa8] sm:$0xff]
    %v188 = vld [vmem:[#allocation4 + $0xb0] sm:$0xff]
    %v189 = vld [vmem:[#allocation4 + $0xb8] sm:$0xff]
    %v190 = vld [vmem:[#allocation4 + $0xc0] sm:$0xff]
    %v191 = vld [vmem:[#allocation4 + $0xc8] sm:$0xff]
    %v192 = vld [vmem:[#allocation4 + $0xd0] sm:$0xff]
    %v193 = vld [vmem:[#allocation4 + $0xd8] sm:$0xff]
    %v194 = vld [vmem:[#allocation4 + $0xe0] sm:$0xff]
    %v195 = vld [vmem:[#allocation4 + $0xe8] sm:$0xff]
    %v196 = vld [vmem:[#allocation4 + $0xf0] sm:$0xff]
    %v197 = vld [vmem:[#allocation4 + $0xf8] sm:$0xff]
    %v198 = vld [vmem:[%s4] sm:$0x1]
    %v200 = vlaneseq
    %v201 = vshrl.u32 %v200, 7
    %v202 = vsub.s32 0, %v201
    %v203 = vrot.slane %v198, %v202
    %205 = vmatprep.subr.mxu0 0.0
    %206 = vmatpush1.msra.mxu0 %v181
    %207 = vmatprep.subr.mxu0 0.0
    %208 = vmatpush1.msra.mxu0 %v180
    %209 = vmatprep.subr.mxu0 0.0
    %210 = vmatpush1.msra.mxu0 %v179
    %211 = vmatprep.subr.mxu0 0.0
    %212 = vmatpush1.msra.mxu0 %v178
    %213 = vmatprep.subr.mxu0 0.0
    %214 = vmatpush1.msra.mxu0 %v177
    %215 = vmatprep.subr.mxu0 0.0
    %216 = vmatpush1.msra.mxu0 %v176
    %217 = vmatprep.subr.mxu0 0.0
    %218 = vmatpush1.msra.mxu0 %v175
    %219 = vmatprep.subr.mxu0 0.0
    %220 = vmatpush1.msra.mxu0 %v174
    %221 = vmatprep.subr.mxu0 0.0
    %222 = vmatpush1.msra.mxu0 %v173
    %223 = vmatprep.subr.mxu0 0.0
    %224 = vmatpush1.msra.mxu0 %v172
    %225 = vmatprep.subr.mxu0 0.0
    %226 = vmatpush1.msra.mxu0 %v171
    %227 = vmatprep.subr.mxu0 0.0
    %228 = vmatpush1.msra.mxu0 %v170
    %229 = vmatprep.subr.mxu0 0.0
    %230 = vmatpush1.msra.mxu0 %v169
    %231 = vmatprep.subr.mxu0 0.0
    %232 = vmatpush1.msra.mxu0 %v168
    %233 = vmatprep.subr.mxu0 0.0
    %234 = vmatpush1.msra.mxu0 %v167
    %235 = vmatprep.subr.mxu0 0.0
    %236 = vmatpush1.msra.mxu0 %v166
    %237 = vmatprep.subr.mxu0 0.0
    %238 = vmatpush2.msra.mxu0 %v197
    %239 = vmatprep.subr.mxu0 0.0
    %240 = vmatpush2.msra.mxu0 %v196
    %241 = vmatprep.subr.mxu0 0.0
    %242 = vmatpush2.msra.mxu0 %v195
    %243 = vmatprep.subr.mxu0 0.0
    %244 = vmatpush2.msra.mxu0 %v194
    %245 = vmatprep.subr.mxu0 0.0
    %246 = vmatpush2.msra.mxu0 %v193
    %247 = vmatprep.subr.mxu0 0.0
    %248 = vmatpush2.msra.mxu0 %v192
    %249 = vmatprep.subr.mxu0 0.0
    %250 = vmatpush2.msra.mxu0 %v191
    %251 = vmatprep.subr.mxu0 0.0
    %252 = vmatpush2.msra.mxu0 %v190
    %253 = vmatprep.subr.mxu0 0.0
    %254 = vmatpush2.msra.mxu0 %v189
    %255 = vmatprep.subr.mxu0 0.0
    %256 = vmatpush2.msra.mxu0 %v188
    %257 = vmatprep.subr.mxu0 0.0
    %258 = vmatpush2.msra.mxu0 %v187
    %259 = vmatprep.subr.mxu0 0.0
    %260 = vmatpush2.msra.mxu0 %v186
    %261 = vmatprep.subr.mxu0 0.0
    %262 = vmatpush2.msra.mxu0 %v185
    %263 = vmatprep.subr.mxu0 0.0
    %264 = vmatpush2.msra.mxu0 %v184
    %265 = vmatprep.subr.mxu0 0.0
    %266 = vmatpush2.msra.mxu0 %v183
    %267 = vmatprep.subr.mxu0 0.0
    %268 = vmatpush2.msra.mxu0 %v182
    %269 = vmatprep.mubr.f32.mxu0 %v165
    %270 = vmatmul.mubr.f32.gmra.mxu0 %v164
    %v271 = vpop.f32.mrf.mxu0
    %v272 = vadd.f32 %v203, %v271
    %v273 = vpop.f32.mrf.mxu0
    %274 = vdwg.mxu0
    %v275 = vadd.f32 %v272, %v48
    %v276 = vtanh.pop %v275
    %277 = vst [vmem:[%s5] sm:$0xff] %v276
    // Predicated region
    $region30: #{resblock_apply.1} parent=1 // pred_check
      _
    $region31: #{resblock_apply.1} parent=1 // pred_check_branch
      %279 = sbr.rel (0) target = $region33
    $region32: #{resblock_apply.1} parent=1 // pred_region
      _
    $region33: #{resblock_apply.1} parent=1 // pred_fallthru
      _
    // Predicated region
    $region34: #{resblock_apply.1} parent=1 // pred_check
      _
    $region35: #{resblock_apply.1} parent=1 // pred_check_branch
      %281 = sbr.rel (0) target = $region37
    $region36: #{resblock_apply.1} parent=1 // pred_region
      _
    $region37: #{resblock_apply.1} parent=1 // pred_fallthru
      _
    %282 = vsyncpa [#allocation3], 1
    %283 = vsyncpa [#allocation5], 1

</llo_original>
